<compile_context>
chip_gen: v5e
topology: v5e:2x2
jax: 0.10.0
libtpu: 0.0.40
codegen_flags: <defaults>
</compile_context>

<pallas_src>
import functools

import jax
import jax.numpy as jnp
from jax.experimental import pallas as pl
from jax.experimental.pallas import tpu as pltpu


def _cdiv(a, b):
    return -(-a // b)


def _round_up(a, b):
    return _cdiv(a, b) * b


def _chip_defaults():
    """Per-generation (n_par, row-tile cap). Conservative fallback."""
    kind = ""
    try:
        kind = (jax.devices()[0].device_kind or "").lower()
    except Exception:
        pass
    if "v7" in kind:
        return 2, 4096          # 2 TCs / chip, 64 MiB VMEM, ~3.2 TB/s
    if "v4" in kind or "v5p" in kind:
        return 2, 2048          # megacore: 2 TCs
    if "v5" in kind:
        return 1, 1024          # v5e (~0.8 TB/s): depth + less tail padding
    return 1, 2048              # v6e & unknown: single TensorCore


def _n3_kernel(h_re, h_im, r_re, r_im, t_re, t_im, out_ref, acc_ref,
               *, batch, tile_b, needs_mask):
    # Grid = (n_par cores, steps_per_core). acc_ref is a per-core persistent
    # (8, D) f32 accumulator; out_ref is this core's (1, 8, 128) partial.
    c = pl.program_id(0)
    i = pl.program_id(1)

    @pl.when(i == 0)
    def _init():
        acc_ref[...] = jnp.zeros_like(acc_ref)

    def cubed_modulus(re_ref, im_ref):
        re = re_ref[...].astype(jnp.float32)
        im = im_ref[...].astype(jnp.float32)
        m2 = re * re + im * im          # |z|^2
        return m2 * jnp.sqrt(m2)        # |z|^3 (modulus is non-negative)

    # Pure elementwise (VPU + one EUP sqrt) work; HBM-bound regardless.
    val = (cubed_modulus(h_re, h_im)
           + cubed_modulus(r_re, r_im)
           + cubed_modulus(t_re, t_im))

    if needs_mask:
        # Logical (unclamped) row offset of this block. Rows >= batch are
        # either undefined data from a partial-tail DMA or duplicated rows
        # from a clamped block index -> zero them BEFORE accumulating.
        block_start = (c * pl.num_programs(1) + i) * tile_b
        row = jax.lax.broadcasted_iota(jnp.int32, val.shape, 0)
        val = jnp.where(row + block_start < batch, val, 0.0)

    # Fold the (tile_b, D) tile into the vreg-sized (8, D) accumulator:
    # sublane-aligned elementwise adds only, no cross-lane (XLU) work.
    d = val.shape[-1]
    acc_ref[...] += jnp.sum(val.reshape(tile_b // 8, 8, d), axis=0)

    @pl.when(i == pl.num_programs(1) - 1)
    def _finalize():
        # Single tiny cross-lane/sublane reduce per core, stored as a
        # lane-dense (8,128) broadcast so the final store is an unmasked vst.
        total = jnp.sum(acc_ref[...])
        out_ref[...] = jnp.full(out_ref.shape, total, jnp.float32)


def complex_n3(head_embs, rel_embs, tail_embs, *, tile_b=None, n_par=None,
               vmem_budget_bytes=24 * 1024 * 1024):
    """head_embs/rel_embs/tail_embs: tuples (re, im) of (B, D) arrays.

    Inputs may be f32 or bf16; accumulation is always f32 (kernel upcasts).
    """
    h_re, h_im = head_embs
    r_re, r_im = rel_embs
    t_re, t_im = tail_embs
    B, D = h_re.shape
    itemsize = jnp.dtype(h_re.dtype).itemsize
    # Sublane packing granularity: 8 rows (f32), 16 (bf16), 32 (8-bit).
    sublane = 8 * max(1, 4 // itemsize)

    chip_n_par, chip_cap = _chip_defaults()
    if n_par is None:
        n_par = chip_n_par

    if tile_b is None:
        # VMEM ceiling: 6 double-buffered inputs dominate in-flight bytes.
        per_row = 6 * 2 * D * itemsize
        cap = min(chip_cap,
                  max(sublane, (vmem_budget_bytes // per_row) // sublane * sublane))
        # Depth-aware sizing: aim for >= ~8 pipelined steps per core with a
        # 512-row floor (already ~85% of HBM roofline) so DMA/compute overlap.
        depth_target = _round_up(_cdiv(B, n_par * 8), sublane)
        tile_b = min(cap, max(min(512, cap), depth_target))
    # Never wider than one core's share of the batch; keep sublane alignment.
    tile_b = max(sublane, min(int(tile_b), _round_up(_cdiv(B, n_par), sublane)))
    tile_b = _round_up(tile_b, sublane)

    n_blocks = _cdiv(B, tile_b)                 # blocks with >=1 valid row
    n_par = max(1, min(n_par, n_blocks))        # never give a core zero data
    steps_per_core = _cdiv(n_blocks, n_par)
    # Mask only if some block carries rows >= B (ragged tail / rounding blocks).
    needs_mask = (n_par * steps_per_core * tile_b) != B

    def in_index(c, i):
        # Clamp so rounding blocks past the end re-read the last real block
        # (their rows are masked to zero in-kernel) -> never a fully
        # out-of-bounds DMA, and NO wrapper-side jnp.pad copy.
        return (jnp.minimum(c * steps_per_core + i, n_blocks - 1), 0)

    in_spec = pl.BlockSpec((tile_b, D), in_index)
    out_spec = pl.BlockSpec((1, 8, 128), lambda c, i: (c, 0, 0))

    in_flight = 6 * 2 * tile_b * D * itemsize + 8 * D * 4
    vmem_limit = int(min(max(in_flight + (8 << 20), 32 << 20), 56 << 20))

    kernel = functools.partial(_n3_kernel, batch=B, tile_b=tile_b,
                               needs_mask=needs_mask)

    cost = pl.CostEstimate(
        flops=5 * 6 * B * D,                 # muls/adds per complex element
        transcendentals=3 * B * D,           # one sqrt per complex element
        bytes_accessed=6 * B * D * itemsize + n_par * 8 * 128 * 4,
    )

    partials = pl.pallas_call(
        kernel,
        out_shape=jax.ShapeDtypeStruct((n_par, 8, 128), jnp.float32),
        grid=(n_par, steps_per_core),
        in_specs=[in_spec] * 6,
        out_specs=out_spec,
        scratch_shapes=[pltpu.VMEM((8, D), jnp.float32)],
        compiler_params=pltpu.CompilerParams(
            dimension_semantics=("parallel", "arbitrary"),
            vmem_limit_bytes=vmem_limit,
        ),
        cost_estimate=cost,
    )(h_re, h_im, r_re, r_im, t_re, t_im)

    # Each core's partial is broadcast over its (8,128) block; take one lane.
    # Division by factors[0].shape[0] (= original batch size) stays here.
    return jnp.sum(partials[:, 0, 0]) / jnp.float32(B)


def _reference(head_embs, rel_embs, tail_embs):
    def f(pair):
        re, im = pair
        return jnp.sqrt(re.astype(jnp.float32) ** 2 + im.astype(jnp.float32) ** 2)

    factors = (f(head_embs), f(rel_embs), f(tail_embs))
    norm = sum(jnp.sum(jnp.abs(fac) ** 3) for fac in factors)
    return norm / factors[0].shape[0]


if __name__ == "__main__":
    key = jax.random.PRNGKey(0)
    B, D = 16, 128  # small demo: 16 triples, ComplEx embedding dim 128 (+128 imag)
    keys = jax.random.split(key, 6)
    h_re = jax.random.normal(keys[0], (B, D), dtype=jnp.float32)
    h_im = jax.random.normal(keys[1], (B, D), dtype=jnp.float32)
    r_re = jax.random.normal(keys[2], (B, D), dtype=jnp.float32)
    r_im = jax.random.normal(keys[3], (B, D), dtype=jnp.float32)
    t_re = jax.random.normal(keys[4], (B, D), dtype=jnp.float32)
    t_im = jax.random.normal(keys[5], (B, D), dtype=jnp.float32)

    out = complex_n3((h_re, h_im), (r_re, r_im), (t_re, t_im))
    out = jax.block_until_ready(out)

    ref = _reference((h_re, h_im), (r_re, r_im), (t_re, t_im))
    assert jnp.allclose(out, ref, rtol=1e-4, atol=1e-4), (out, ref)

    # Exercise the ragged-tail masking path too (B not a multiple of 8).
    B2 = 11
    out2 = complex_n3((h_re[:B2], h_im[:B2]), (r_re[:B2], r_im[:B2]),
                      (t_re[:B2], t_im[:B2]))
    out2 = jax.block_until_ready(out2)
    ref2 = _reference((h_re[:B2], h_im[:B2]), (r_re[:B2], r_im[:B2]),
                      (t_re[:B2], t_im[:B2]))
    assert jnp.allclose(out2, ref2, rtol=1e-4, atol=1e-4), (out2, ref2)

    print("KERNEL_OK")
</pallas_src>

<mosaic_0001>
module attributes {stable_mosaic.version = 11 : i64} {
  func.func @_n3_kernel(%arg0: i32, %arg1: i32, %arg2: memref<16x128xf32, #tpu.memory_space<vmem>>, %arg3: memref<16x128xf32, #tpu.memory_space<vmem>>, %arg4: memref<16x128xf32, #tpu.memory_space<vmem>>, %arg5: memref<16x128xf32, #tpu.memory_space<vmem>>, %arg6: memref<16x128xf32, #tpu.memory_space<vmem>>, %arg7: memref<16x128xf32, #tpu.memory_space<vmem>>, %arg8: memref<1x8x128xf32, #tpu.memory_space<vmem>>, %arg9: memref<8x128xf32, #tpu.memory_space<vmem>>) attributes {dimension_semantics = [#tpu.dimension_semantics<parallel>, #tpu.dimension_semantics<arbitrary>], iteration_bounds = array<i64: 1, 1>, scalar_prefetch = 0 : i64, scratch_operands = 1 : i64, tpu.core_type = #tpu.core_type<tc>, window_params = [{transform_indices = @transform_0, window_bounds = array<i64: 16, 128>}, {transform_indices = @transform_1, window_bounds = array<i64: 16, 128>}, {transform_indices = @transform_2, window_bounds = array<i64: 16, 128>}, {transform_indices = @transform_3, window_bounds = array<i64: 16, 128>}, {transform_indices = @transform_4, window_bounds = array<i64: 16, 128>}, {transform_indices = @transform_5, window_bounds = array<i64: 16, 128>}, {transform_indices = @transform_6, window_bounds = array<i64: 1, 8, 128>}]} {
    %c0_i32 = arith.constant 0 : i32
    %0 = arith.cmpi eq, %arg1, %c0_i32 : i32
    %1 = arith.extui %0 : i1 to i32
    %c0_i32_0 = arith.constant 0 : i32
    %2 = arith.cmpi ne, %1, %c0_i32_0 : i32
    scf.if %2 {
      %cst_18 = arith.constant 0.000000e+00 : f32
      %34 = vector.broadcast %cst_18 : f32 to vector<8x128xf32>
      %c0_19 = arith.constant 0 : index
      %c0_20 = arith.constant 0 : index
      %35 = vector.load %arg9[%c0_19, %c0_20] : memref<8x128xf32, #tpu.memory_space<vmem>>, vector<8x128xf32>
      tpu.vector_store %arg9[%c0_19, %c0_20], %34 {strides = array<i32>} : memref<8x128xf32, #tpu.memory_space<vmem>>, vector<8x128xf32>,
    } else {
    }
    %c0 = arith.constant 0 : index
    %c0_1 = arith.constant 0 : index
    %3 = vector.load %arg2[%c0, %c0_1] : memref<16x128xf32, #tpu.memory_space<vmem>>, vector<16x128xf32>
    %c0_2 = arith.constant 0 : index
    %c0_3 = arith.constant 0 : index
    %4 = vector.load %arg3[%c0_2, %c0_3] : memref<16x128xf32, #tpu.memory_space<vmem>>, vector<16x128xf32>
    %5 = arith.mulf %3, %3 : vector<16x128xf32>
    %6 = arith.mulf %4, %4 : vector<16x128xf32>
    %7 = arith.addf %5, %6 : vector<16x128xf32>
    %8 = math.sqrt %7 : vector<16x128xf32>
    %9 = arith.mulf %7, %8 : vector<16x128xf32>
    %c0_4 = arith.constant 0 : index
    %c0_5 = arith.constant 0 : index
    %10 = vector.load %arg4[%c0_4, %c0_5] : memref<16x128xf32, #tpu.memory_space<vmem>>, vector<16x128xf32>
    %c0_6 = arith.constant 0 : index
    %c0_7 = arith.constant 0 : index
    %11 = vector.load %arg5[%c0_6, %c0_7] : memref<16x128xf32, #tpu.memory_space<vmem>>, vector<16x128xf32>
    %12 = arith.mulf %10, %10 : vector<16x128xf32>
    %13 = arith.mulf %11, %11 : vector<16x128xf32>
    %14 = arith.addf %12, %13 : vector<16x128xf32>
    %15 = math.sqrt %14 : vector<16x128xf32>
    %16 = arith.mulf %14, %15 : vector<16x128xf32>
    %17 = arith.addf %9, %16 : vector<16x128xf32>
    %c0_8 = arith.constant 0 : index
    %c0_9 = arith.constant 0 : index
    %18 = vector.load %arg6[%c0_8, %c0_9] : memref<16x128xf32, #tpu.memory_space<vmem>>, vector<16x128xf32>
    %c0_10 = arith.constant 0 : index
    %c0_11 = arith.constant 0 : index
    %19 = vector.load %arg7[%c0_10, %c0_11] : memref<16x128xf32, #tpu.memory_space<vmem>>, vector<16x128xf32>
    %20 = arith.mulf %18, %18 : vector<16x128xf32>
    %21 = arith.mulf %19, %19 : vector<16x128xf32>
    %22 = arith.addf %20, %21 : vector<16x128xf32>
    %23 = math.sqrt %22 : vector<16x128xf32>
    %24 = arith.mulf %22, %23 : vector<16x128xf32>
    %25 = arith.addf %17, %24 : vector<16x128xf32>
    %c0_12 = arith.constant 0 : index
    %c0_13 = arith.constant 0 : index
    %26 = vector.load %arg9[%c0_12, %c0_13] : memref<8x128xf32, #tpu.memory_space<vmem>>, vector<8x128xf32>
    %27 = vector.shape_cast %25 : vector<16x128xf32> to vector<2x8x128xf32>
    %cst = arith.constant dense<0.000000e+00> : vector<8x128xf32>
    %28 = vector.multi_reduction <add>, %27, %cst [0] : vector<2x8x128xf32> to vector<8x128xf32>
    %29 = arith.addf %26, %28 : vector<8x128xf32>
    %c0_14 = arith.constant 0 : index
    %c0_15 = arith.constant 0 : index
    %30 = vector.load %arg9[%c0_14, %c0_15] : memref<8x128xf32, #tpu.memory_space<vmem>>, vector<8x128xf32>
    tpu.vector_store %arg9[%c0_14, %c0_15], %29 {strides = array<i32>} : memref<8x128xf32, #tpu.memory_space<vmem>>, vector<8x128xf32>,
    %c0_i32_16 = arith.constant 0 : i32
    %31 = arith.cmpi eq, %arg1, %c0_i32_16 : i32
    %32 = arith.extui %31 : i1 to i32
    %c0_i32_17 = arith.constant 0 : i32
    %33 = arith.cmpi ne, %32, %c0_i32_17 : i32
    scf.if %33 {
      %c0_18 = arith.constant 0 : index
      %c0_19 = arith.constant 0 : index
      %34 = vector.load %arg9[%c0_18, %c0_19] : memref<8x128xf32, #tpu.memory_space<vmem>>, vector<8x128xf32>
      %35 = vector.shape_cast %34 : vector<8x128xf32> to vector<1x8x128xf32>
      %cst_20 = arith.constant dense<0.000000e+00> : vector<1xf32>
      %36 = vector.multi_reduction <add>, %35, %cst_20 [1, 2] : vector<1x8x128xf32> to vector<1xf32>
      %37 = vector.shape_cast %36 : vector<1xf32> to vector<1x1x1xf32>
      %38 = vector.extract %37[0, 0, 0] : f32 from vector<1x1x1xf32>
      %39 = vector.broadcast %38 : f32 to vector<1x8x128xf32>
      %c0_21 = arith.constant 0 : index
      %c0_22 = arith.constant 0 : index
      %c0_23 = arith.constant 0 : index
      %40 = vector.load %arg8[%c0_21, %c0_22, %c0_23] : memref<1x8x128xf32, #tpu.memory_space<vmem>>, vector<1x8x128xf32>
      tpu.vector_store %arg8[%c0_21, %c0_22, %c0_23], %39 {strides = array<i32>} : memref<1x8x128xf32, #tpu.memory_space<vmem>>, vector<1x8x128xf32>,
    } else {
    }
    return
  }
  func.func @transform_0(%arg0: i32, %arg1: i32) -> (i32, i32) {
    %c1_i32 = arith.constant 1 : i32
    %0 = arith.muli %arg0, %c1_i32 : i32
    %1 = arith.addi %0, %arg1 : i32
    %c0_i32 = arith.constant 0 : i32
    %2 = arith.minsi %1, %c0_i32 : i32
    %c0_i32_0 = arith.constant 0 : i32
    %c0_i32_1 = arith.constant 0 : i32
    return %2, %c0_i32_0 : i32, i32
  }
  func.func @transform_1(%arg0: i32, %arg1: i32) -> (i32, i32) {
    %c1_i32 = arith.constant 1 : i32
    %0 = arith.muli %arg0, %c1_i32 : i32
    %1 = arith.addi %0, %arg1 : i32
    %c0_i32 = arith.constant 0 : i32
    %2 = arith.minsi %1, %c0_i32 : i32
    %c0_i32_0 = arith.constant 0 : i32
    %c0_i32_1 = arith.constant 0 : i32
    return %2, %c0_i32_0 : i32, i32
  }
  func.func @transform_2(%arg0: i32, %arg1: i32) -> (i32, i32) {
    %c1_i32 = arith.constant 1 : i32
    %0 = arith.muli %arg0, %c1_i32 : i32
    %1 = arith.addi %0, %arg1 : i32
    %c0_i32 = arith.constant 0 : i32
    %2 = arith.minsi %1, %c0_i32 : i32
    %c0_i32_0 = arith.constant 0 : i32
    %c0_i32_1 = arith.constant 0 : i32
    return %2, %c0_i32_0 : i32, i32
  }
  func.func @transform_3(%arg0: i32, %arg1: i32) -> (i32, i32) {
    %c1_i32 = arith.constant 1 : i32
    %0 = arith.muli %arg0, %c1_i32 : i32
    %1 = arith.addi %0, %arg1 : i32
    %c0_i32 = arith.constant 0 : i32
    %2 = arith.minsi %1, %c0_i32 : i32
    %c0_i32_0 = arith.constant 0 : i32
    %c0_i32_1 = arith.constant 0 : i32
    return %2, %c0_i32_0 : i32, i32
  }
  func.func @transform_4(%arg0: i32, %arg1: i32) -> (i32, i32) {
    %c1_i32 = arith.constant 1 : i32
    %0 = arith.muli %arg0, %c1_i32 : i32
    %1 = arith.addi %0, %arg1 : i32
    %c0_i32 = arith.constant 0 : i32
    %2 = arith.minsi %1, %c0_i32 : i32
    %c0_i32_0 = arith.constant 0 : i32
    %c0_i32_1 = arith.constant 0 : i32
    return %2, %c0_i32_0 : i32, i32
  }
  func.func @transform_5(%arg0: i32, %arg1: i32) -> (i32, i32) {
    %c1_i32 = arith.constant 1 : i32
    %0 = arith.muli %arg0, %c1_i32 : i32
    %1 = arith.addi %0, %arg1 : i32
    %c0_i32 = arith.constant 0 : i32
    %2 = arith.minsi %1, %c0_i32 : i32
    %c0_i32_0 = arith.constant 0 : i32
    %c0_i32_1 = arith.constant 0 : i32
    return %2, %c0_i32_0 : i32, i32
  }
  func.func @transform_6(%arg0: i32, %arg1: i32) -> (i32, i32, i32) {
    %c0_i32 = arith.constant 0 : i32
    %c0_i32_0 = arith.constant 0 : i32
    %c0_i32_1 = arith.constant 0 : i32
    return %arg0, %c0_i32, %c0_i32_0 : i32, i32, i32
  }
}

</mosaic_0001>

<llo_original>
// kernel: tpu_custom_call.1
$region0: #{tpu_custom_call.1}
  #allocation0 [shape = 'u32[]', space=smem, size = 0x4, offset = 0x4, fixed_abs, tag = 'smem constant byte address 0x4 - core index']
  #allocation1 [shape = 'u32[72,128]{1,0:T(1,128)}', space=vmem, size = 0x9000, scoped, tag = 'internal scratch']
  #allocation2 [shape = 'f32[8,128]{1,0:T(8,128)}', space=vmem, size = 0x1000, scoped, tag = 'scratch operand']
  %s0 = inlined_call_operand.hbm [shape: f32[16,128], index: 0, kind: input, shape index: {}]
  %s1 = inlined_call_operand.hbm [shape: f32[16,128], index: 1, kind: input, shape index: {}]
  %s2 = inlined_call_operand.hbm [shape: f32[16,128], index: 2, kind: input, shape index: {}]
  %s3 = inlined_call_operand.hbm [shape: f32[16,128], index: 3, kind: input, shape index: {}]
  %s4 = inlined_call_operand.hbm [shape: f32[16,128], index: 4, kind: input, shape index: {}]
  %s5 = inlined_call_operand.hbm [shape: f32[16,128], index: 5, kind: input, shape index: {}]
  %s6 = inlined_call_operand.hbm [shape: f32[1,8,128], index: 6, kind: output, shape index: {}]
  %s7 = sld [smem:[#allocation0]]
  $region66: #{tpu_custom_call.1} parent=0
    _
  %s9 = ssub.s32 1, %s7
  %s10 = scalar_select 0, %s9, %s7
  $region1: #{tpu_custom_call.1} parent=0
    #allocation3 [shape = 'u8[8192]{0}', space=vmem, size = 0x2000, scoped, tag = 'input window, operand 0, single buffered']
    #allocation4 [shape = 's32[1]{0}', space=sflag, size = 0x4, scoped, tag = 'scoped memory for tpu_custom_call.1']
    #allocation5 [shape = 's32[1]{0}', space=sflag, size = 0x4, scoped, tag = 'scoped memory for tpu_custom_call.1']
    #allocation6 [shape = 'u8[8192]{0}', space=vmem, size = 0x2000, scoped, tag = 'input window, operand 1, single buffered']
    #allocation7 [shape = 's32[1]{0}', space=sflag, size = 0x4, scoped, tag = 'scoped memory for tpu_custom_call.1']
    #allocation8 [shape = 'u8[8192]{0}', space=vmem, size = 0x2000, scoped, tag = 'input window, operand 2, single buffered']
    #allocation9 [shape = 'u8[8192]{0}', space=vmem, size = 0x2000, scoped, tag = 'input window, operand 3, single buffered']
    #allocation10 [shape = 's32[1]{0}', space=sflag, size = 0x4, scoped, tag = 'scoped memory for tpu_custom_call.1']
    #allocation11 [shape = 'u8[8192]{0}', space=vmem, size = 0x2000, scoped, tag = 'input window, operand 4, single buffered']
    #allocation12 [shape = 'u8[8192]{0}', space=vmem, size = 0x2000, scoped, tag = 'input window, operand 5, single buffered']
    #allocation13 [shape = 's32[1]{0}', space=sflag, size = 0x4, scoped, tag = 'scoped memory for tpu_custom_call.1']
    #allocation14 [shape = 'u8[4096]{0}', space=vmem, size = 0x1000, scoped, tag = 'output window, operand 0, single buffered']
    %11 = vsyncpa [#allocation4], 0
    %12 = vsyncpa [#allocation7], 0
    %13 = vsyncpa [#allocation10], 0
    %14 = vsyncpa [#allocation13], 0
    %15 = vsyncpa [#allocation5], 0
    // Predicated region
    $region2: #{tpu_custom_call.1} parent=1 // pred_check
      _
    $region3: #{tpu_custom_call.1} parent=1 // pred_check_branch
      %17 = sbr.rel (0) target = $region5
    $region4: #{tpu_custom_call.1} parent=1 // pred_region
      %s18 = sadd.s32 0, 0
      %p19 = scmp.lt.s32.totalorder %s18, 0
      %s20 = scalar_select %p19, %s18, 0
      %s21 = smul.u32 2, %s20
      %23 = vsyncadd [#allocation4], 0
      %s24 = smul.addr %s21, 8
      %s25 = scalar_lea.hbm %s0, %s24
      %s26 = sshll.u32 %s25, 4
      %s27 = int_to_ptr.hbm [resolvable:$true] %s26
      %s28 = sshll.u32 [#allocation3], 4
      %s29 = int_to_ptr.vmem [resolvable:$true] %s28
      %34 = dma.hbm_to_vmem [thread:$0]  %s27, 256, %s29, [#allocation4], 128, 128, 8
    $region5: #{tpu_custom_call.1} parent=1 // pred_fallthru
      _
    // Predicated region
    $region6: #{tpu_custom_call.1} parent=1 // pred_check
      _
    $region7: #{tpu_custom_call.1} parent=1 // pred_check_branch
      %36 = sbr.rel (0) target = $region9
    $region8: #{tpu_custom_call.1} parent=1 // pred_region
      %s37 = sadd.s32 0, 0
      %p38 = scmp.lt.s32.totalorder %s37, 0
      %s39 = scalar_select %p38, %s37, 0
      %s40 = smul.u32 2, %s39
      %42 = vsyncadd [#allocation7], 0
      %s43 = smul.addr %s40, 8
      %s44 = scalar_lea.hbm %s1, %s43
      %s45 = sshll.u32 %s44, 4
      %s46 = int_to_ptr.hbm [resolvable:$true] %s45
      %s47 = sshll.u32 [#allocation6], 4
      %s48 = int_to_ptr.vmem [resolvable:$true] %s47
      %53 = dma.hbm_to_vmem [thread:$0]  %s46, 256, %s48, [#allocation7], 128, 128, 8
    $region9: #{tpu_custom_call.1} parent=1 // pred_fallthru
      _
    // Predicated region
    $region10: #{tpu_custom_call.1} parent=1 // pred_check
      _
    $region11: #{tpu_custom_call.1} parent=1 // pred_check_branch
      %55 = sbr.rel (0) target = $region13
    $region12: #{tpu_custom_call.1} parent=1 // pred_region
      %s56 = sadd.s32 0, 0
      %p57 = scmp.lt.s32.totalorder %s56, 0
      %s58 = scalar_select %p57, %s56, 0
      %s59 = smul.u32 2, %s58
      %61 = vsyncadd [#allocation7], 0
      %s62 = smul.addr %s59, 8
      %s63 = scalar_lea.hbm %s2, %s62
      %s64 = sshll.u32 %s63, 4
      %s65 = int_to_ptr.hbm [resolvable:$true] %s64
      %s66 = sshll.u32 [#allocation8], 4
      %s67 = int_to_ptr.vmem [resolvable:$true] %s66
      %72 = dma.hbm_to_vmem [thread:$0]  %s65, 256, %s67, [#allocation7], 128, 128, 8
    $region13: #{tpu_custom_call.1} parent=1 // pred_fallthru
      _
    // Predicated region
    $region14: #{tpu_custom_call.1} parent=1 // pred_check
      _
    $region15: #{tpu_custom_call.1} parent=1 // pred_check_branch
      %74 = sbr.rel (0) target = $region17
    $region16: #{tpu_custom_call.1} parent=1 // pred_region
      %s75 = sadd.s32 0, 0
      %p76 = scmp.lt.s32.totalorder %s75, 0
      %s77 = scalar_select %p76, %s75, 0
      %s78 = smul.u32 2, %s77
      %80 = vsyncadd [#allocation10], 0
      %s81 = smul.addr %s78, 8
      %s82 = scalar_lea.hbm %s3, %s81
      %s83 = sshll.u32 %s82, 4
      %s84 = int_to_ptr.hbm [resolvable:$true] %s83
      %s85 = sshll.u32 [#allocation9], 4
      %s86 = int_to_ptr.vmem [resolvable:$true] %s85
      %91 = dma.hbm_to_vmem [thread:$0]  %s84, 256, %s86, [#allocation10], 128, 128, 8
    $region17: #{tpu_custom_call.1} parent=1 // pred_fallthru
      _
    // Predicated region
    $region18: #{tpu_custom_call.1} parent=1 // pred_check
      _
    $region19: #{tpu_custom_call.1} parent=1 // pred_check_branch
      %93 = sbr.rel (0) target = $region21
    $region20: #{tpu_custom_call.1} parent=1 // pred_region
      %s94 = sadd.s32 0, 0
      %p95 = scmp.lt.s32.totalorder %s94, 0
      %s96 = scalar_select %p95, %s94, 0
      %s97 = smul.u32 2, %s96
      %99 = vsyncadd [#allocation10], 0
      %s100 = smul.addr %s97, 8
      %s101 = scalar_lea.hbm %s4, %s100
      %s102 = sshll.u32 %s101, 4
      %s103 = int_to_ptr.hbm [resolvable:$true] %s102
      %s104 = sshll.u32 [#allocation11], 4
      %s105 = int_to_ptr.vmem [resolvable:$true] %s104
      %110 = dma.hbm_to_vmem [thread:$0]  %s103, 256, %s105, [#allocation10], 128, 128, 8
    $region21: #{tpu_custom_call.1} parent=1 // pred_fallthru
      _
    // Predicated region
    $region22: #{tpu_custom_call.1} parent=1 // pred_check
      _
    $region23: #{tpu_custom_call.1} parent=1 // pred_check_branch
      %112 = sbr.rel (0) target = $region25
    $region24: #{tpu_custom_call.1} parent=1 // pred_region
      %s113 = sadd.s32 0, 0
      %p114 = scmp.lt.s32.totalorder %s113, 0
      %s115 = scalar_select %p114, %s113, 0
      %s116 = smul.u32 2, %s115
      %118 = vsyncadd [#allocation13], 0
      %s119 = smul.addr %s116, 8
      %s120 = scalar_lea.hbm %s5, %s119
      %s121 = sshll.u32 %s120, 4
      %s122 = int_to_ptr.hbm [resolvable:$true] %s121
      %s123 = sshll.u32 [#allocation12], 4
      %s124 = int_to_ptr.vmem [resolvable:$true] %s123
      %129 = dma.hbm_to_vmem [thread:$0]  %s122, 256, %s124, [#allocation13], 128, 128, 8
    $region25: #{tpu_custom_call.1} parent=1 // pred_fallthru
      _
    // Predicated region
    $region26: #{tpu_custom_call.1} parent=1 // pred_check
      _
    $region27: #{tpu_custom_call.1} parent=1 // pred_check_branch
      %131 = sbr.rel (0) target = $region29
    $region28: #{tpu_custom_call.1} parent=1 // pred_region
      %133 = dma.done [#allocation4], 256
    $region29: #{tpu_custom_call.1} parent=1 // pred_fallthru
      _
    // Predicated region
    $region30: #{tpu_custom_call.1} parent=1 // pred_check
      _
    $region31: #{tpu_custom_call.1} parent=1 // pred_check_branch
      %135 = sbr.rel (0) target = $region33
    $region32: #{tpu_custom_call.1} parent=1 // pred_region
      %137 = dma.done [#allocation7], 256
    $region33: #{tpu_custom_call.1} parent=1 // pred_fallthru
      _
    // Predicated region
    $region34: #{tpu_custom_call.1} parent=1 // pred_check
      _
    $region35: #{tpu_custom_call.1} parent=1 // pred_check_branch
      %139 = sbr.rel (0) target = $region37
    $region36: #{tpu_custom_call.1} parent=1 // pred_region
      %141 = dma.done [#allocation7], 256
    $region37: #{tpu_custom_call.1} parent=1 // pred_fallthru
      _
    // Predicated region
    $region38: #{tpu_custom_call.1} parent=1 // pred_check
      _
    $region39: #{tpu_custom_call.1} parent=1 // pred_check_branch
      %143 = sbr.rel (0) target = $region41
    $region40: #{tpu_custom_call.1} parent=1 // pred_region
      %145 = dma.done [#allocation10], 256
    $region41: #{tpu_custom_call.1} parent=1 // pred_fallthru
      _
    // Predicated region
    $region42: #{tpu_custom_call.1} parent=1 // pred_check
      _
    $region43: #{tpu_custom_call.1} parent=1 // pred_check_branch
      %147 = sbr.rel (0) target = $region45
    $region44: #{tpu_custom_call.1} parent=1 // pred_region
      %149 = dma.done [#allocation10], 256
    $region45: #{tpu_custom_call.1} parent=1 // pred_fallthru
      _
    // Predicated region
    $region46: #{tpu_custom_call.1} parent=1 // pred_check
      _
    $region47: #{tpu_custom_call.1} parent=1 // pred_check_branch
      %151 = sbr.rel (0) target = $region49
    $region48: #{tpu_custom_call.1} parent=1 // pred_region
      %153 = dma.done [#allocation13], 256
    $region49: #{tpu_custom_call.1} parent=1 // pred_fallthru
      _
    %s154 = sadd.s32 0, 0
    %p155 = scmp.lt.s32.totalorder %s154, 0
    %s156 = scalar_select %p155, %s154, 0
    %s157 = smul.u32 2, %s156
    %s158 = sadd.s32 0, 0
    %p159 = scmp.lt.s32.totalorder %s158, 0
    %s160 = scalar_select %p159, %s158, 0
    %s161 = smul.u32 2, %s160
    %s162 = sadd.s32 0, 0
    %p163 = scmp.lt.s32.totalorder %s162, 0
    %s164 = scalar_select %p163, %s162, 0
    %s165 = smul.u32 2, %s164
    %s166 = sadd.s32 0, 0
    %p167 = scmp.lt.s32.totalorder %s166, 0
    %s168 = scalar_select %p167, %s166, 0
    %s169 = smul.u32 2, %s168
    %s170 = sadd.s32 0, 0
    %p171 = scmp.lt.s32.totalorder %s170, 0
    %s172 = scalar_select %p171, %s170, 0
    %s173 = smul.u32 2, %s172
    %s174 = sadd.s32 0, 0
    %p175 = scmp.lt.s32.totalorder %s174, 0
    %s176 = scalar_select %p175, %s174, 0
    %s177 = smul.u32 2, %s176
    %p178 = scmp.eq.s32.totalorder 0, 0
    // Predicated region
    $region50: #{tpu_custom_call.1} parent=1 // pred_check
      %p179 = pneg %p178
    $region51: #{tpu_custom_call.1} parent=1 // pred_check_branch
      %181 = sbr.rel (%p179) target = $region53
    $region52: #{tpu_custom_call.1} parent=1 // pred_region
      %182 = vst [vmem:[#allocation2] sm:$0xff] 0.0
    $region53: #{tpu_custom_call.1} parent=1 // pred_fallthru
      _
    %v183 = vld [vmem:[#allocation3] sm:$0xff]
    %v184 = vld [vmem:[#allocation3 + $0x8] sm:$0xff]
    %v185 = vld [vmem:[#allocation6] sm:$0xff]
    %v186 = vld [vmem:[#allocation6 + $0x8] sm:$0xff]
    %v187 = vmul.f32 %v183, %v183
    %v188 = vmul.f32 %v184, %v184
    %v189 = vmul.f32 %v185, %v185
    %v190 = vmul.f32 %v186, %v186
    %v191 = vadd.f32 %v187, %v189
    %v192 = vadd.f32 %v188, %v190
    %v193 = vrsqrt.pop %v191
    %v194 = vmul.f32 %v193, %v191
    %v195 = vmul.f32 %v194, %v193
    %v196 = vmul.f32 0.5, %v195
    %v197 = vsub.f32 1.5, %v196
    %v198 = vmul.f32 %v193, %v197
    %v199 = vmul.f32 %v191, %v198
    %vm200 = vcmp.eq.f32.partialorder %v191, inf
    %v201 = vsel %vm200, %v191, %v199
    %vm202 = vcmp.eq.f32.partialorder %v191, 0.0
    %v203 = vand.u32 %v191, 2147483648
    %v204 = vsel %vm202, %v203, %v201
    %v205 = vrsqrt.pop %v192
    %v206 = vmul.f32 %v205, %v192
    %v207 = vmul.f32 %v206, %v205
    %v208 = vmul.f32 0.5, %v207
    %v209 = vsub.f32 1.5, %v208
    %v210 = vmul.f32 %v205, %v209
    %v211 = vmul.f32 %v192, %v210
    %vm212 = vcmp.eq.f32.partialorder %v192, inf
    %v213 = vsel %vm212, %v192, %v211
    %vm214 = vcmp.eq.f32.partialorder %v192, 0.0
    %v215 = vand.u32 %v192, 2147483648
    %v216 = vsel %vm214, %v215, %v213
    %v217 = vmul.f32 %v191, %v204
    %v218 = vmul.f32 %v192, %v216
    %v219 = vld [vmem:[#allocation8] sm:$0xff]
    %v220 = vld [vmem:[#allocation8 + $0x8] sm:$0xff]
    %v221 = vld [vmem:[#allocation9] sm:$0xff]
    %v222 = vld [vmem:[#allocation9 + $0x8] sm:$0xff]
    %v223 = vmul.f32 %v219, %v219
    %v224 = vmul.f32 %v220, %v220
    %v225 = vmul.f32 %v221, %v221
    %v226 = vmul.f32 %v222, %v222
    %v227 = vadd.f32 %v223, %v225
    %v228 = vadd.f32 %v224, %v226
    %v229 = vrsqrt.pop %v227
    %v230 = vmul.f32 %v229, %v227
    %v231 = vmul.f32 %v230, %v229
    %v232 = vmul.f32 0.5, %v231
    %v233 = vsub.f32 1.5, %v232
    %v234 = vmul.f32 %v229, %v233
    %v235 = vmul.f32 %v227, %v234
    %vm236 = vcmp.eq.f32.partialorder %v227, inf
    %v237 = vsel %vm236, %v227, %v235
    %vm238 = vcmp.eq.f32.partialorder %v227, 0.0
    %v239 = vand.u32 %v227, 2147483648
    %v240 = vsel %vm238, %v239, %v237
    %v241 = vrsqrt.pop %v228
    %v242 = vmul.f32 %v241, %v228
    %v243 = vmul.f32 %v242, %v241
    %v244 = vmul.f32 0.5, %v243
    %v245 = vsub.f32 1.5, %v244
    %v246 = vmul.f32 %v241, %v245
    %v247 = vmul.f32 %v228, %v246
    %vm248 = vcmp.eq.f32.partialorder %v228, inf
    %v249 = vsel %vm248, %v228, %v247
    %vm250 = vcmp.eq.f32.partialorder %v228, 0.0
    %v251 = vand.u32 %v228, 2147483648
    %v252 = vsel %vm250, %v251, %v249
    %v253 = vmul.f32 %v227, %v240
    %v254 = vmul.f32 %v228, %v252
    %v255 = vadd.f32 %v217, %v253
    %v256 = vadd.f32 %v218, %v254
    %v257 = vld [vmem:[#allocation11] sm:$0xff]
    %v258 = vld [vmem:[#allocation11 + $0x8] sm:$0xff]
    %v259 = vld [vmem:[#allocation12] sm:$0xff]
    %v260 = vld [vmem:[#allocation12 + $0x8] sm:$0xff]
    %v261 = vmul.f32 %v257, %v257
    %v262 = vmul.f32 %v258, %v258
    %v263 = vmul.f32 %v259, %v259
    %v264 = vmul.f32 %v260, %v260
    %v265 = vadd.f32 %v261, %v263
    %v266 = vadd.f32 %v262, %v264
    %v267 = vrsqrt.pop %v265
    %v268 = vmul.f32 %v267, %v265
    %v269 = vmul.f32 %v268, %v267
    %v270 = vmul.f32 0.5, %v269
    %v271 = vsub.f32 1.5, %v270
    %v272 = vmul.f32 %v267, %v271
    %v273 = vmul.f32 %v265, %v272
    %vm274 = vcmp.eq.f32.partialorder %v265, inf
    %v275 = vsel %vm274, %v265, %v273
    %vm276 = vcmp.eq.f32.partialorder %v265, 0.0
    %v277 = vand.u32 %v265, 2147483648
    %v278 = vsel %vm276, %v277, %v275
    %v279 = vrsqrt.pop %v266
    %v280 = vmul.f32 %v279, %v266
    %v281 = vmul.f32 %v280, %v279
    %v282 = vmul.f32 0.5, %v281
    %v283 = vsub.f32 1.5, %v282
    %v284 = vmul.f32 %v279, %v283
    %v285 = vmul.f32 %v266, %v284
    %vm286 = vcmp.eq.f32.partialorder %v266, inf
    %v287 = vsel %vm286, %v266, %v285
    %vm288 = vcmp.eq.f32.partialorder %v266, 0.0
    %v289 = vand.u32 %v266, 2147483648
    %v290 = vsel %vm288, %v289, %v287
    %v291 = vmul.f32 %v265, %v278
    %v292 = vmul.f32 %v266, %v290
    %v293 = vadd.f32 %v255, %v291
    %v294 = vadd.f32 %v256, %v292
    %v295 = vld [vmem:[#allocation2] sm:$0xff]
    %v296 = vadd.f32 %v293, %v294
    %v297 = vadd.f32 %v295, %v296
    %298 = vst [vmem:[#allocation2] sm:$0xff] %v297
    // Predicated region
    $region54: #{tpu_custom_call.1} parent=1 // pred_check
      %p299 = pneg %p178
    $region55: #{tpu_custom_call.1} parent=1 // pred_check_branch
      %301 = sbr.rel (%p299) target = $region57
    $region56: #{tpu_custom_call.1} parent=1 // pred_region
      %v302 = vld [vmem:[#allocation2] sm:$0xff]
      %303 = vadd.xlane.f32.xlu0 %v302
      %v304 = vpop.xlane.xlu0 %303
      %v305 = vrot.slane %v304, 4
      %v306 = vadd.f32 %v304, %v305
      %v307 = vrot.slane %v306, 2
      %v308 = vadd.f32 %v306, %v307
      %v309 = vrot.slane %v308, 1
      %v310 = vadd.f32 %v308, %v309
      %s311 = vtos %v310
      %v312 = vstv %s311
      %313 = vst [vmem:[#allocation14] sm:$0xff] %v312
    $region57: #{tpu_custom_call.1} parent=1 // pred_fallthru
      _
    // Predicated region
    $region58: #{tpu_custom_call.1} parent=1 // pred_check
      _
    $region59: #{tpu_custom_call.1} parent=1 // pred_check_branch
      %315 = sbr.rel (0) target = $region61
    $region60: #{tpu_custom_call.1} parent=1 // pred_region
      %317 = vsyncadd [#allocation5], 0
      %s319 = sshll.u32 [#allocation14], 4
      %s320 = int_to_ptr.vmem [resolvable:$true] %s319
      %s321 = sshll.u32 %s6, 4
      %s322 = int_to_ptr.hbm [resolvable:$true] %s321
      %324 = dma.vmem_to_hbm [thread:$0]  %s320, 128, %s322, [#allocation5]
    $region61: #{tpu_custom_call.1} parent=1 // pred_fallthru
      _
    // Predicated region
    $region62: #{tpu_custom_call.1} parent=1 // pred_check
      _
    $region63: #{tpu_custom_call.1} parent=1 // pred_check_branch
      %326 = sbr.rel (0) target = $region65
    $region64: #{tpu_custom_call.1} parent=1 // pred_region
      %328 = dma.done [#allocation5], 128
    $region65: #{tpu_custom_call.1} parent=1 // pred_fallthru
      _
    %329 = vsyncpa [#allocation4], 1
    %330 = vsyncpa [#allocation7], 1
    %331 = vsyncpa [#allocation10], 1
    %332 = vsyncpa [#allocation13], 1
    %333 = vsyncpa [#allocation5], 1

</llo_original>
